<compile_context>
chip_gen: v6e
topology: v6e:2x2x1
jax: 0.10.0
libtpu: 0.0.40
codegen_flags: <defaults>
</compile_context>

<pallas_src>
import jax
import jax.numpy as jnp
from jax import lax
from jax.experimental import pallas as pl
from jax.experimental.pallas import tpu as pltpu


def _round_up(x, m):
    return (x + m - 1) // m * m


def _sublane_granule(dtype):
    # Native sublane packing: 8 rows for 4-byte, 16 for 2-byte, 32 for 1-byte dtypes.
    return {4: 8, 2: 16, 1: 32}.get(jnp.dtype(dtype).itemsize, 8)


def _pick_tile(dim, cap, granule, prefer):
    """Pick (tile, padded_dim) for one dimension.

    Prefers an exact divisor of `dim` (no pad / no output slice): the largest
    multiple of `prefer` (e.g. 256, MXU-friendly) that divides `dim` and is <= cap,
    else the largest multiple of `granule`. Ragged dims fall back to padding.
    """
    cap = max(int(cap), granule)
    if dim % granule == 0:
        best = None
        best_pref = None
        t = granule
        limit = min(dim, cap)
        while t <= limit:
            if dim % t == 0:
                best = t
                if t % prefer == 0:
                    best_pref = t
            t += granule
        tile = best_pref if best_pref is not None else best
        if tile is not None:
            return tile, dim
    tile = min(cap, _round_up(dim, granule))
    return tile, _round_up(dim, tile)


def _wn_linear_kernel(scale_ref, x_ref, v_ref, o_ref, acc_ref):
    # grid = (M-tiles, N-tiles, K-tiles); K (reduction) is the last, "arbitrary" axis.
    @pl.when(pl.program_id(2) == 0)
    def _init():
        acc_ref[...] = jnp.zeros_like(acc_ref)

    # x tile: (tm, tk); v tile: (tn, tk) in V's native (out_dim, in_dim) layout.
    # Contract both on their K (lane) axis == x @ v_tile.T, accumulate in f32 on MXU.
    acc_ref[...] += lax.dot_general(
        x_ref[...], v_ref[...],
        dimension_numbers=(((1,), (1,)), ((), ())),
        preferred_element_type=jnp.float32)

    @pl.when(pl.program_id(2) == pl.num_programs(2) - 1)
    def _finalize():
        # Epilogue: apply g / ||V||_F once per output tile, then cast.
        o_ref[...] = (acc_ref[...] * scale_ref[0]).astype(o_ref.dtype)


def linear_transform(x, v, g, *, tm=None, tn=None, tk=None,
                     mxu_dtype=None, v_buffers=None):
    """y = x @ (g * V / ||V||_F).T   with x: (B, in_dim), v: (out_dim, in_dim), g scalar.

    mxu_dtype=jnp.bfloat16 is recommended on all TPU generations (v5e included):
    it halves HBM traffic and runs the MXU at full rate; the norm/scale and the
    accumulation stay f32. For skinny-M (single M tile) HBM-bound calls, persist V
    in bf16 *outside* this function — a per-call cast costs an extra HBM pass over V.
    """
    out_dtype = x.dtype
    M, K = x.shape
    N, K2 = v.shape
    assert K == K2, (x.shape, v.shape)

    # Hoisted scalar: g / ||V||_F  (f32, from the un-cast, un-padded V).
    v32 = v.astype(jnp.float32)
    g32 = jnp.asarray(g, dtype=jnp.float32)
    scale = (g32 / jnp.sqrt(jnp.sum(v32 * v32))).reshape((1,))

    if mxu_dtype is not None:
        if x.dtype != mxu_dtype:
            x = x.astype(mxu_dtype)
        if v.dtype != mxu_dtype:
            v = v.astype(mxu_dtype)

    in_dtype = x.dtype                      # dtype actually fed to the MXU
    in_bytes = jnp.dtype(in_dtype).itemsize
    out_bytes = jnp.dtype(out_dtype).itemsize
    sub = _sublane_granule(in_dtype)

    # Defaults: bigger tiles for narrower dtypes (HBM-bound regime -> more reuse).
    if tm is None:
        tm = 1024 if in_bytes < 4 else 512
    if tn is None:
        tn = 1024 if in_bytes < 4 else 512
    if tk is None:
        tk = 1024

    tm, Mp = _pick_tile(M, tm, sub, prefer=sub)     # sublane granule follows dtype
    tn, Np = _pick_tile(N, tn, 128, prefer=256)     # prefer MXU-width multiples
    tk, Kp = _pick_tile(K, tk, 128, prefer=256)

    if (Mp, Kp) != (M, K):
        x = jnp.pad(x, ((0, Mp - M), (0, Kp - K)))
    if (Np, Kp) != (N, K):
        v = jnp.pad(v, ((0, Np - N), (0, Kp - K)))

    grid = (Mp // tm, Np // tn, Kp // tk)

    # Explicit VMEM budget: double-buffered x/out, v with its buffer depth,
    # the f32 accumulator, plus headroom for compiler scratch. Defaults stay
    # well under v7x's 64 MiB per-TC VMEM.
    v_bufs = 2 if v_buffers is None else int(v_buffers)
    vmem_bytes = (2 * tm * tk * in_bytes
                  + v_bufs * tn * tk * in_bytes
                  + 2 * tm * tn * out_bytes
                  + tm * tn * 4)
    vmem_limit = int(min(vmem_bytes + (8 << 20), 112 << 20))

    v_spec_kwargs = {}
    if v_buffers is not None:
        v_spec_kwargs["pipeline_mode"] = pl.Buffered(v_bufs)
    v_spec = pl.BlockSpec((tn, tk), lambda i, j, k: (j, k), **v_spec_kwargs)

    out = pl.pallas_call(
        _wn_linear_kernel,
        out_shape=jax.ShapeDtypeStruct((Mp, Np), out_dtype),
        grid_spec=pltpu.PrefetchScalarGridSpec(
            num_scalar_prefetch=0,
            grid=grid,
            in_specs=[
                # scalar scale lives in SMEM (no VMEM tile, no per-step DMA cost)
                pl.BlockSpec(memory_space=pltpu.MemorySpace.SMEM),
                pl.BlockSpec((tm, tk), lambda i, j, k: (i, k)),   # x tile
                v_spec,                                           # V tile (native layout)
            ],
            out_specs=pl.BlockSpec((tm, tn), lambda i, j, k: (i, j)),
            scratch_shapes=[pltpu.VMEM((tm, tn), jnp.float32)],
        ),
        compiler_params=pltpu.CompilerParams(
            # TODO(synk): on v7x, confirm 2-TC sharding; else use pltpu.CORE_PARALLEL
            # on the leading axis (or pl.core_map).
            dimension_semantics=("parallel", "parallel", "arbitrary"),
            vmem_limit_bytes=vmem_limit),
    )(scale, x, v)

    if (Mp, Np) != (M, N):
        out = out[:M, :N]
    return out


if __name__ == "__main__":
    key = jax.random.PRNGKey(0)
    k_x1, k_v1, k_x2, k_v2 = jax.random.split(key, 4)

    # --- Test 1: tiny shapes (ragged N/K -> padded single tile + output slice) ---
    B, in_dim, out_dim = 8, 32, 16
    x1 = jax.random.normal(k_x1, (B, in_dim), dtype=jnp.float32)
    v1 = jax.random.normal(k_v1, (out_dim, in_dim), dtype=jnp.float32) * 0.1
    g1 = jnp.sqrt(jnp.sum(v1 * v1))  # weight_norm init: W_eff == v initially

    out1 = linear_transform(x1, v1, g1)
    jax.block_until_ready(out1)
    ref1 = x1 @ (g1 * v1 / jnp.sqrt(jnp.sum(v1 * v1))).T
    assert out1.shape == (B, out_dim), out1.shape
    assert jnp.allclose(out1, ref1, atol=1e-5, rtol=1e-5), float(jnp.max(jnp.abs(out1 - ref1)))

    # --- Test 2: multi-tile grid, dims divide tiles exactly (no pad, no slice) ---
    B2, in2, out2 = 16, 256, 256
    x2 = jax.random.normal(k_x2, (B2, in2), dtype=jnp.float32)
    v2 = jax.random.normal(k_v2, (out2, in2), dtype=jnp.float32) * 0.05
    g2 = jnp.float32(1.7)

    out2f = linear_transform(x2, v2, g2, tm=8, tn=128, tk=128)  # grid = (2, 2, 2)
    jax.block_until_ready(out2f)
    ref2 = x2 @ (g2 * v2 / jnp.sqrt(jnp.sum(v2 * v2))).T
    assert out2f.shape == (B2, out2), out2f.shape
    assert jnp.allclose(out2f, ref2, atol=1e-4, rtol=1e-4), float(jnp.max(jnp.abs(out2f - ref2)))

    # --- Test 3: bf16 MXU inputs; requested tm=8 is rounded up to the bf16 sublane
    #     tile (16), fixing the packed-layout concern; accumulation/scale stay f32. ---
    out2b = linear_transform(x2, v2, g2, tm=8, tn=128, tk=128, mxu_dtype=jnp.bfloat16)
    jax.block_until_ready(out2b)
    assert out2b.shape == (B2, out2), out2b.shape
    assert jnp.allclose(out2b, ref2, atol=1e-1, rtol=1e-1), float(jnp.max(jnp.abs(out2b - ref2)))

    # --- Test 4: default (auto) tiles, bf16 path, V pre-cast by the caller ---
    out2c = linear_transform(x2.astype(jnp.bfloat16), v2.astype(jnp.bfloat16), g2,
                             mxu_dtype=jnp.bfloat16)
    jax.block_until_ready(out2c)
    assert out2c.shape == (B2, out2), out2c.shape
    assert jnp.allclose(out2c.astype(jnp.float32), ref2, atol=2e-1, rtol=2e-1), \
        float(jnp.max(jnp.abs(out2c.astype(jnp.float32) - ref2)))

    print("KERNEL_OK")
</pallas_src>

<mosaic_0001>
module attributes {stable_mosaic.version = 11 : i64} {
  func.func @_wn_linear_kernel(%arg0: i32, %arg1: i32, %arg2: i32, %arg3: memref<1xf32, #tpu.memory_space<smem>>, %arg4: memref<8x128xf32, #tpu.memory_space<vmem>>, %arg5: memref<128x128xf32, #tpu.memory_space<vmem>>, %arg6: memref<8x128xf32, #tpu.memory_space<vmem>>, %arg7: memref<8x128xf32, #tpu.memory_space<vmem>>) attributes {dimension_semantics = [#tpu.dimension_semantics<parallel>, #tpu.dimension_semantics<parallel>, #tpu.dimension_semantics<arbitrary>], iteration_bounds = array<i64: 1, 1, 1>, scalar_prefetch = 0 : i64, scratch_operands = 1 : i64, tpu.core_type = #tpu.core_type<tc>, window_params = [{transform_indices = @transform_0, window_bounds = array<i64: 1>}, {transform_indices = @transform_1, window_bounds = array<i64: 8, 128>}, {transform_indices = @transform_2, window_bounds = array<i64: 128, 128>}, {transform_indices = @transform_3, window_bounds = array<i64: 8, 128>}]} {
    %c0_i32 = arith.constant 0 : i32
    %0 = arith.cmpi eq, %arg2, %c0_i32 : i32
    %1 = arith.extui %0 : i1 to i32
    %c0_i32_0 = arith.constant 0 : i32
    %2 = arith.cmpi ne, %1, %c0_i32_0 : i32
    scf.if %2 {
      %cst_10 = arith.constant 0.000000e+00 : f32
      %12 = vector.broadcast %cst_10 : f32 to vector<8x128xf32>
      %c0_11 = arith.constant 0 : index
      %c0_12 = arith.constant 0 : index
      %13 = vector.load %arg7[%c0_11, %c0_12] : memref<8x128xf32, #tpu.memory_space<vmem>>, vector<8x128xf32>
      tpu.vector_store %arg7[%c0_11, %c0_12], %12 {strides = array<i32>} : memref<8x128xf32, #tpu.memory_space<vmem>>, vector<8x128xf32>,
    } else {
    }
    %c0 = arith.constant 0 : index
    %c0_1 = arith.constant 0 : index
    %3 = vector.load %arg7[%c0, %c0_1] : memref<8x128xf32, #tpu.memory_space<vmem>>, vector<8x128xf32>
    %c0_2 = arith.constant 0 : index
    %c0_3 = arith.constant 0 : index
    %4 = vector.load %arg4[%c0_2, %c0_3] : memref<8x128xf32, #tpu.memory_space<vmem>>, vector<8x128xf32>
    %c0_4 = arith.constant 0 : index
    %c0_5 = arith.constant 0 : index
    %5 = vector.load %arg5[%c0_4, %c0_5] : memref<128x128xf32, #tpu.memory_space<vmem>>, vector<128x128xf32>
    %cst = arith.constant dense<0.000000e+00> : vector<8x128xf32>
    %6 = tpu.matmul %4, %5, %cst {dimension_numbers = #tpu.dot_dimension_numbers<[1], [1], [0], [0], [0, 0, 1, 0], [], []>} : vector<8x128xf32>, vector<128x128xf32>, vector<8x128xf32> -> vector<8x128xf32>
    %7 = arith.addf %3, %6 : vector<8x128xf32>
    %c0_6 = arith.constant 0 : index
    %c0_7 = arith.constant 0 : index
    %8 = vector.load %arg7[%c0_6, %c0_7] : memref<8x128xf32, #tpu.memory_space<vmem>>, vector<8x128xf32>
    tpu.vector_store %arg7[%c0_6, %c0_7], %7 {strides = array<i32>} : memref<8x128xf32, #tpu.memory_space<vmem>>, vector<8x128xf32>,
    %c0_i32_8 = arith.constant 0 : i32
    %9 = arith.cmpi eq, %arg2, %c0_i32_8 : i32
    %10 = arith.extui %9 : i1 to i32
    %c0_i32_9 = arith.constant 0 : i32
    %11 = arith.cmpi ne, %10, %c0_i32_9 : i32
    scf.if %11 {
      %c0_10 = arith.constant 0 : index
      %c0_11 = arith.constant 0 : index
      %12 = vector.load %arg7[%c0_10, %c0_11] : memref<8x128xf32, #tpu.memory_space<vmem>>, vector<8x128xf32>
      %c0_12 = arith.constant 0 : index
      %13 = memref.load %arg3[%c0_12] : memref<1xf32, #tpu.memory_space<smem>>
      %14 = vector.broadcast %13 : f32 to vector<8x128xf32>
      %15 = arith.mulf %12, %14 : vector<8x128xf32>
      %c0_13 = arith.constant 0 : index
      %c0_14 = arith.constant 0 : index
      %16 = vector.load %arg6[%c0_13, %c0_14] : memref<8x128xf32, #tpu.memory_space<vmem>>, vector<8x128xf32>
      tpu.vector_store %arg6[%c0_13, %c0_14], %15 {strides = array<i32>} : memref<8x128xf32, #tpu.memory_space<vmem>>, vector<8x128xf32>,
    } else {
    }
    return
  }
  func.func @transform_0(%arg0: i32, %arg1: i32, %arg2: i32) -> i32 {
    %c0_i32 = arith.constant 0 : i32
    %c0_i32_0 = arith.constant 0 : i32
    return %c0_i32 : i32
  }
  func.func @transform_1(%arg0: i32, %arg1: i32, %arg2: i32) -> (i32, i32) {
    %c0_i32 = arith.constant 0 : i32
    return %arg0, %arg2 : i32, i32
  }
  func.func @transform_2(%arg0: i32, %arg1: i32, %arg2: i32) -> (i32, i32) {
    %c0_i32 = arith.constant 0 : i32
    return %arg1, %arg2 : i32, i32
  }
  func.func @transform_3(%arg0: i32, %arg1: i32, %arg2: i32) -> (i32, i32) {
    %c0_i32 = arith.constant 0 : i32
    return %arg0, %arg1 : i32, i32
  }
}

</mosaic_0001>

<llo_original>
// kernel: tpu_custom_call.1
$region0: #{tpu_custom_call.1}
  #allocation0 [shape = 'u32[]', space=smem, size = 0x4, offset = 0x4, fixed_abs, tag = 'smem constant byte address 0x4 - core index']
  #allocation1 [shape = 'u32[144,128]{1,0:T(1,128)}', space=vmem, size = 0x12000, scoped, tag = 'internal scratch']
  #allocation2 [shape = 'f32[8,128]{1,0:T(8,128)}', space=vmem, size = 0x1000, scoped, tag = 'scratch operand']
  #allocation3 [shape = 'f32[1]{0:T(128)S(6)}', space=smem, size = 0x200, scoped, tag = 'scoped memory for tpu_custom_call.1']
  %s0 = inlined_call_operand.<no memory space> [shape: f32[1], index: 0, kind: input, shape index: {}]
  %s1 = inlined_call_operand.hbm [shape: f32[8,128], index: 1, kind: input, shape index: {}]
  %s2 = inlined_call_operand.hbm [shape: f32[128,128], index: 2, kind: input, shape index: {}]
  %s3 = inlined_call_operand.hbm [shape: f32[8,128], index: 3, kind: output, shape index: {}]
  %s4 = sld [smem:[#allocation0]]
  $region38: #{tpu_custom_call.1} parent=0
    _
  %s6 = ssub.s32 1, %s4
  %s7 = scalar_select 0, %s6, %s4
  %8 = sst [smem:[#allocation3]] %s0
  $region1: #{tpu_custom_call.1} parent=0
    #allocation4 [shape = 'u8[4096]{0}', space=vmem, size = 0x1000, scoped, tag = 'input window, operand 1, single buffered']
    #allocation5 [shape = 's32[1]{0}', space=sflag, size = 0x4, scoped, tag = 'scoped memory for tpu_custom_call.1']
    #allocation6 [shape = 's32[1]{0}', space=sflag, size = 0x4, scoped, tag = 'scoped memory for tpu_custom_call.1']
    #allocation7 [shape = 'u8[65536]{0}', space=vmem, size = 0x10000, scoped, tag = 'input window, operand 2, single buffered']
    #allocation8 [shape = 's32[1]{0}', space=sflag, size = 0x4, scoped, tag = 'scoped memory for tpu_custom_call.1']
    #allocation9 [shape = 'u8[4096]{0}', space=vmem, size = 0x1000, scoped, tag = 'output window, operand 0, single buffered']
    %9 = vsyncpa [#allocation5], 0
    %10 = vsyncpa [#allocation8], 0
    %11 = vsyncpa [#allocation6], 0
    // Predicated region
    $region2: #{tpu_custom_call.1} parent=1 // pred_check
      _
    $region3: #{tpu_custom_call.1} parent=1 // pred_check_branch
      %13 = sbr.rel (0) target = $region5
    $region4: #{tpu_custom_call.1} parent=1 // pred_region
      _
    $region5: #{tpu_custom_call.1} parent=1 // pred_fallthru
      _
    // Predicated region
    $region6: #{tpu_custom_call.1} parent=1 // pred_check
      _
    $region7: #{tpu_custom_call.1} parent=1 // pred_check_branch
      %15 = sbr.rel (0) target = $region9
    $region8: #{tpu_custom_call.1} parent=1 // pred_region
      %s17 = ssub.s32 128, 128
      %18 = vsyncadd [#allocation5], %s17
      %s20 = sshll.u32 [#allocation4], 4
      %s21 = int_to_ptr.vmem [resolvable:$true] %s20
      %23 = dma.hbm_to_vmem [thread:$0]  %s1, 128, %s21, [#allocation5]
    $region9: #{tpu_custom_call.1} parent=1 // pred_fallthru
      _
    // Predicated region
    $region10: #{tpu_custom_call.1} parent=1 // pred_check
      _
    $region11: #{tpu_custom_call.1} parent=1 // pred_check_branch
      %25 = sbr.rel (0) target = $region13
    $region12: #{tpu_custom_call.1} parent=1 // pred_region
      %s27 = ssub.s32 2048, 2048
      %28 = vsyncadd [#allocation8], %s27
      %s29 = sshll.u32 [#allocation7], 4
      %s30 = int_to_ptr.vmem [resolvable:$true] %s29
      %35 = dma.hbm_to_vmem [thread:$0]  %s2, 2048, %s30, [#allocation8], 128, 128, 8
    $region13: #{tpu_custom_call.1} parent=1 // pred_fallthru
      _
    // Predicated region
    $region14: #{tpu_custom_call.1} parent=1 // pred_check
      _
    $region15: #{tpu_custom_call.1} parent=1 // pred_check_branch
      %37 = sbr.rel (0) target = $region17
    $region16: #{tpu_custom_call.1} parent=1 // pred_region
      %38 = dma.done [#allocation5], 128
    $region17: #{tpu_custom_call.1} parent=1 // pred_fallthru
      _
    // Predicated region
    $region18: #{tpu_custom_call.1} parent=1 // pred_check
      _
    $region19: #{tpu_custom_call.1} parent=1 // pred_check_branch
      %40 = sbr.rel (0) target = $region21
    $region20: #{tpu_custom_call.1} parent=1 // pred_region
      %41 = dma.done [#allocation8], 2048
    $region21: #{tpu_custom_call.1} parent=1 // pred_fallthru
      _
    %p42 = scmp.eq.s32.totalorder 0, 0
    // Predicated region
    $region22: #{tpu_custom_call.1} parent=1 // pred_check
      %p43 = pneg %p42
    $region23: #{tpu_custom_call.1} parent=1 // pred_check_branch
      %45 = sbr.rel (%p43) target = $region25
    $region24: #{tpu_custom_call.1} parent=1 // pred_region
      %46 = vst [vmem:[#allocation2] sm:$0xff] 0.0
    $region25: #{tpu_custom_call.1} parent=1 // pred_fallthru
      _
    %v47 = vld [vmem:[#allocation2] sm:$0xff]
    %v48 = vld [vmem:[#allocation4] sm:$0xff]
    %v49 = vld [vmem:[#allocation7] sm:$0xff]
    %v50 = vld [vmem:[#allocation7 + $0x8] sm:$0xff]
    %v51 = vld [vmem:[#allocation7 + $0x10] sm:$0xff]
    %v52 = vld [vmem:[#allocation7 + $0x18] sm:$0xff]
    %v53 = vld [vmem:[#allocation7 + $0x20] sm:$0xff]
    %v54 = vld [vmem:[#allocation7 + $0x28] sm:$0xff]
    %v55 = vld [vmem:[#allocation7 + $0x30] sm:$0xff]
    %v56 = vld [vmem:[#allocation7 + $0x38] sm:$0xff]
    %v57 = vld [vmem:[#allocation7 + $0x40] sm:$0xff]
    %v58 = vld [vmem:[#allocation7 + $0x48] sm:$0xff]
    %v59 = vld [vmem:[#allocation7 + $0x50] sm:$0xff]
    %v60 = vld [vmem:[#allocation7 + $0x58] sm:$0xff]
    %v61 = vld [vmem:[#allocation7 + $0x60] sm:$0xff]
    %v62 = vld [vmem:[#allocation7 + $0x68] sm:$0xff]
    %v63 = vld [vmem:[#allocation7 + $0x70] sm:$0xff]
    %v64 = vld [vmem:[#allocation7 + $0x78] sm:$0xff]
    %65 = vmatprep.subr.mxu0 0.0
    %66 = vmatpush1.xpose.msra.mxu0 %v64
    %67 = vmatprep.subr.mxu0 0.0
    %68 = vmatpush1.xpose.msra.mxu0 %v63
    %69 = vmatprep.subr.mxu0 0.0
    %70 = vmatpush1.xpose.msra.mxu0 %v62
    %71 = vmatprep.subr.mxu0 0.0
    %72 = vmatpush1.xpose.msra.mxu0 %v61
    %73 = vmatprep.subr.mxu0 0.0
    %74 = vmatpush1.xpose.msra.mxu0 %v60
    %75 = vmatprep.subr.mxu0 0.0
    %76 = vmatpush1.xpose.msra.mxu0 %v59
    %77 = vmatprep.subr.mxu0 0.0
    %78 = vmatpush1.xpose.msra.mxu0 %v58
    %79 = vmatprep.subr.mxu0 0.0
    %80 = vmatpush1.xpose.msra.mxu0 %v57
    %81 = vmatprep.subr.mxu0 0.0
    %82 = vmatpush1.xpose.msra.mxu0 %v56
    %83 = vmatprep.subr.mxu0 0.0
    %84 = vmatpush1.xpose.msra.mxu0 %v55
    %85 = vmatprep.subr.mxu0 0.0
    %86 = vmatpush1.xpose.msra.mxu0 %v54
    %87 = vmatprep.subr.mxu0 0.0
    %88 = vmatpush1.xpose.msra.mxu0 %v53
    %89 = vmatprep.subr.mxu0 0.0
    %90 = vmatpush1.xpose.msra.mxu0 %v52
    %91 = vmatprep.subr.mxu0 0.0
    %92 = vmatpush1.xpose.msra.mxu0 %v51
    %93 = vmatprep.subr.mxu0 0.0
    %94 = vmatpush1.xpose.msra.mxu0 %v50
    %95 = vmatprep.subr.mxu0 0.0
    %96 = vmatpush1.xpose.msra.mxu0 %v49
    %97 = vmatprep.subr.mxu0 0.0
    %98 = vmatpush2.xpose.msra.mxu0 0.0
    %99 = vmatprep.subr.mxu0 0.0
    %100 = vmatpush2.xpose.msra.mxu0 0.0
    %101 = vmatprep.subr.mxu0 0.0
    %102 = vmatpush2.xpose.msra.mxu0 0.0
    %103 = vmatprep.subr.mxu0 0.0
    %104 = vmatpush2.xpose.msra.mxu0 0.0
    %105 = vmatprep.subr.mxu0 0.0
    %106 = vmatpush2.xpose.msra.mxu0 0.0
    %107 = vmatprep.subr.mxu0 0.0
    %108 = vmatpush2.xpose.msra.mxu0 0.0
    %109 = vmatprep.subr.mxu0 0.0
    %110 = vmatpush2.xpose.msra.mxu0 0.0
    %111 = vmatprep.subr.mxu0 0.0
    %112 = vmatpush2.xpose.msra.mxu0 0.0
    %113 = vmatprep.subr.mxu0 0.0
    %114 = vmatpush2.xpose.msra.mxu0 0.0
    %115 = vmatprep.subr.mxu0 0.0
    %116 = vmatpush2.xpose.msra.mxu0 0.0
    %117 = vmatprep.subr.mxu0 0.0
    %118 = vmatpush2.xpose.msra.mxu0 0.0
    %119 = vmatprep.subr.mxu0 0.0
    %120 = vmatpush2.xpose.msra.mxu0 0.0
    %121 = vmatprep.subr.mxu0 0.0
    %122 = vmatpush2.xpose.msra.mxu0 0.0
    %123 = vmatprep.subr.mxu0 0.0
    %124 = vmatpush2.xpose.msra.mxu0 0.0
    %125 = vmatprep.subr.mxu0 0.0
    %126 = vmatpush2.xpose.msra.mxu0 0.0
    %127 = vmatprep.subr.mxu0 0.0
    %128 = vmatpush2.xpose.msra.mxu0 0.0
    %129 = vmatprep.mubr.f32.mxu0 0.0
    %130 = vmatmul.mubr.f32.gmra.mxu0 %v48
    %v131 = vpop.f32.mrf.mxu0
    %v132 = vadd.f32 0.0, %v131
    %v133 = vpop.f32.mrf.mxu0
    %134 = vdwg.mxu0
    %v135 = vadd.f32 %v47, %v132
    %136 = vst [vmem:[#allocation2] sm:$0xff] %v135
    // Predicated region
    $region26: #{tpu_custom_call.1} parent=1 // pred_check
      %p137 = pneg %p42
    $region27: #{tpu_custom_call.1} parent=1 // pred_check_branch
      %139 = sbr.rel (%p137) target = $region29
    $region28: #{tpu_custom_call.1} parent=1 // pred_region
      %v140 = vld [vmem:[#allocation2] sm:$0xff]
      %s141 = sld [smem:[#allocation3]]
      %v142 = vstv %s141
      %v143 = vmul.f32 %v140, %v142
      %144 = vst [vmem:[#allocation9] sm:$0xff] %v143
    $region29: #{tpu_custom_call.1} parent=1 // pred_fallthru
      _
    // Predicated region
    $region30: #{tpu_custom_call.1} parent=1 // pred_check
      _
    $region31: #{tpu_custom_call.1} parent=1 // pred_check_branch
      %146 = sbr.rel (0) target = $region33
    $region32: #{tpu_custom_call.1} parent=1 // pred_region
      %s148 = ssub.s32 128, 128
      %149 = vsyncadd [#allocation6], %s148
      %s151 = sshll.u32 [#allocation9], 4
      %s152 = int_to_ptr.vmem [resolvable:$true] %s151
      %154 = dma.vmem_to_hbm [thread:$0]  %s152, 128, %s3, [#allocation6]
    $region33: #{tpu_custom_call.1} parent=1 // pred_fallthru
      _
    // Predicated region
    $region34: #{tpu_custom_call.1} parent=1 // pred_check
      _
    $region35: #{tpu_custom_call.1} parent=1 // pred_check_branch
      %156 = sbr.rel (0) target = $region37
    $region36: #{tpu_custom_call.1} parent=1 // pred_region
      %157 = dma.done [#allocation6], 128
    $region37: #{tpu_custom_call.1} parent=1 // pred_fallthru
      _
    %158 = vsyncpa [#allocation5], 1
    %159 = vsyncpa [#allocation8], 1
    %160 = vsyncpa [#allocation6], 1

</llo_original>
